<compile_context>
chip_gen: v7x
topology: tpu7x:2x2x1
jax: 0.10.0
libtpu: 0.0.40
codegen_flags: <defaults>
</compile_context>

<pallas_src>
import math

import jax
import jax.numpy as jnp
from jax.experimental import pallas as pl
from jax.experimental.pallas import tpu as pltpu


def _round_up(x, m):
    return (x + m - 1) // m * m


def _apply_activation(h, name):
    if name is None:
        return h
    if name == "relu":
        return jnp.maximum(h, 0.0)
    if name == "tanh":
        return jnp.tanh(h)
    if name == "gelu":
        return jax.nn.gelu(h)
    if name == "sigmoid":
        return jax.nn.sigmoid(h)
    raise ValueError(f"unsupported activation: {name}")


def _make_mlp_kernel(num_layers, activation, use_bias):
    """Kernel refs: x_ref, (w0[, b0], w1[, b1], ...), out_ref."""

    def kernel(*refs):
        x_ref, out_ref = refs[0], refs[-1]
        params = refs[1:-1]
        h = x_ref[...].astype(jnp.float32)           # (TM, in_dim)
        idx = 0
        for _ in range(num_layers):
            w = params[idx][...].astype(jnp.float32)  # (in, out) resident in VMEM
            idx += 1
            h = jnp.dot(h, w, preferred_element_type=jnp.float32)
            if use_bias:
                b = params[idx][...].astype(jnp.float32)  # (1, out)
                idx += 1
                h = h + b
            h = _apply_activation(h, activation)
        out_ref[...] = h.astype(out_ref.dtype)

    return kernel


def project_layer_forward(x, weights, biases=None, activation=None, *,
                          token_block=256, vmem_limit_bytes=64 * 1024 * 1024):
    """ProjectLayer.forward.

    x: (..., input_dim); weights: list of (in_i, out_i); biases: optional list
    of (out_i,). Returns (..., output_dim).
    """
    if len(weights) == 0:
        # num_layers == 0: model is nn.Dropout(dropout) -> identity at inference.
        # TODO(synk): training-mode dropout (PRNG mask + 1/(1-p) scale) not implemented.
        return x

    lead = x.shape[:-1]
    in_dim = x.shape[-1]
    out_dim = weights[-1].shape[1]
    M = math.prod(lead) if lead else 1
    x2 = x.reshape(M, in_dim)

    # Large row tile: 256 rows (MXU-friendly, amortizes ~0.35us/step pipeline
    # overhead) when enough rows exist; otherwise a single sublane-aligned block.
    tm = token_block if M >= token_block else _round_up(max(M, 1), 8)
    m_pad = _round_up(M, tm)
    if m_pad != M:
        x2 = jnp.pad(x2, ((0, m_pad - M), (0, 0)))

    use_bias = biases is not None
    inputs = [x2]
    in_specs = [pl.BlockSpec((tm, in_dim), lambda i: (i, 0))]
    for li, w in enumerate(weights):
        inputs.append(w)
        in_specs.append(pl.BlockSpec(w.shape, lambda i: (0, 0)))  # whole weight, VMEM-resident
        if use_bias:
            b2 = biases[li].reshape(1, -1)
            inputs.append(b2)
            in_specs.append(pl.BlockSpec(b2.shape, lambda i: (0, 0)))

    kernel = _make_mlp_kernel(len(weights), activation, use_bias)

    out = pl.pallas_call(
        kernel,
        out_shape=jax.ShapeDtypeStruct((m_pad, out_dim), x.dtype),
        grid_spec=pltpu.PrefetchScalarGridSpec(
            num_scalar_prefetch=0,
            grid=(m_pad // tm,),
            in_specs=in_specs,
            out_specs=pl.BlockSpec((tm, out_dim), lambda i: (i, 0)),
        ),
        compiler_params=pltpu.CompilerParams(
            dimension_semantics=("parallel",),
            vmem_limit_bytes=vmem_limit_bytes,
        ),
    )(*inputs)

    if m_pad != M:
        out = out[:M]
    return out.reshape(*lead, out_dim)


def init_project_layer_params(key, num_layers, input_dim, output_dim,
                              bias=False, is_big=False, dtype=jnp.float32):
    """Mirrors ProjectLayer.__init__ layer-shape logic and nn.Linear init."""
    assert num_layers >= 0
    dims = []
    in_dim = input_dim
    hid = input_dim if is_big else output_dim
    for _ in range(num_layers - 1):
        dims.append((in_dim, hid))
        in_dim = hid
    if num_layers > 0:
        dims.append((in_dim, output_dim))

    weights = []
    biases = [] if bias else None
    for (di, do) in dims:
        key, kw, kb = jax.random.split(key, 3)
        bound = 1.0 / math.sqrt(di)
        weights.append(jax.random.uniform(kw, (di, do), dtype=dtype,
                                          minval=-bound, maxval=bound))
        if bias:
            biases.append(jax.random.uniform(kb, (do,), dtype=dtype,
                                             minval=-bound, maxval=bound))
    return weights, biases


def project_layer_reference(x, weights, biases=None, activation=None):
    h = x
    for li, w in enumerate(weights):
        h = jnp.dot(h, w)
        if biases is not None:
            h = h + biases[li]
        h = _apply_activation(h, activation)
    return h


if __name__ == "__main__":
    # ProjectLayer(num_layers=2, input_dim=128, output_dim=128,
    #              activation="relu", bias=False, dropout=0.0, is_big=False)
    batch, seq = 2, 8
    input_dim, output_dim = 128, 128   # lane-dense dims (multiples of 128)
    num_layers = 2
    activation = "relu"

    key = jax.random.PRNGKey(0)
    k_x, k_p1, k_p2 = jax.random.split(key, 3)

    x = jax.random.normal(k_x, (batch, seq, input_dim), dtype=jnp.float32)

    # Config 1: 2 layers, relu, no bias (module defaults except activation).
    weights, biases = init_project_layer_params(k_p1, num_layers, input_dim,
                                                output_dim, bias=False)
    out = jax.block_until_ready(
        project_layer_forward(x, weights, biases=biases, activation=activation))
    ref = project_layer_reference(x, weights, biases=biases, activation=activation)
    assert out.shape == (batch, seq, output_dim)
    assert jnp.allclose(out, ref, atol=1e-2, rtol=1e-2), "mismatch vs reference (config 1)"

    # Config 2: single layer with bias, no activation.
    w2, b2 = init_project_layer_params(k_p2, 1, input_dim, output_dim, bias=True)
    out2 = jax.block_until_ready(
        project_layer_forward(x, w2, biases=b2, activation=None))
    ref2 = project_layer_reference(x, w2, biases=b2, activation=None)
    assert jnp.allclose(out2, ref2, atol=1e-2, rtol=1e-2), "mismatch vs reference (config 2)"

    print("KERNEL_OK")
</pallas_src>

<mosaic_0001>
module attributes {stable_mosaic.version = 11 : i64} {
  func.func @kernel(%arg0: i32, %arg1: memref<16x128xf32, #tpu.memory_space<vmem>>, %arg2: memref<128x128xf32, #tpu.memory_space<vmem>>, %arg3: memref<128x128xf32, #tpu.memory_space<vmem>>, %arg4: memref<16x128xf32, #tpu.memory_space<vmem>>) attributes {dimension_semantics = [#tpu.dimension_semantics<parallel>], iteration_bounds = array<i64: 1>, scalar_prefetch = 0 : i64, scratch_operands = 0 : i64, tpu.core_type = #tpu.core_type<tc>, window_params = [{transform_indices = @transform_0, window_bounds = array<i64: 16, 128>}, {pipeline_mode = #tpu.pipeline_mode<synchronous>, transform_indices = @transform_1, window_bounds = array<i64: 128, 128>}, {pipeline_mode = #tpu.pipeline_mode<synchronous>, transform_indices = @transform_2, window_bounds = array<i64: 128, 128>}, {transform_indices = @transform_3, window_bounds = array<i64: 16, 128>}]} {
    %c0 = arith.constant 0 : index
    %c0_0 = arith.constant 0 : index
    %0 = vector.load %arg1[%c0, %c0_0] : memref<16x128xf32, #tpu.memory_space<vmem>>, vector<16x128xf32>
    %c0_1 = arith.constant 0 : index
    %c0_2 = arith.constant 0 : index
    %1 = vector.load %arg2[%c0_1, %c0_2] : memref<128x128xf32, #tpu.memory_space<vmem>>, vector<128x128xf32>
    %cst = arith.constant dense<0.000000e+00> : vector<16x128xf32>
    %2 = tpu.matmul %0, %1, %cst {dimension_numbers = #tpu.dot_dimension_numbers<[1], [0], [0], [1], [0, 0, 1, 1], [], []>} : vector<16x128xf32>, vector<128x128xf32>, vector<16x128xf32> -> vector<16x128xf32>
    %cst_3 = arith.constant 0.000000e+00 : f32
    %3 = vector.broadcast %cst_3 : f32 to vector<16x128xf32>
    %4 = arith.maximumf %2, %3 : vector<16x128xf32>
    %c0_4 = arith.constant 0 : index
    %c0_5 = arith.constant 0 : index
    %5 = vector.load %arg3[%c0_4, %c0_5] : memref<128x128xf32, #tpu.memory_space<vmem>>, vector<128x128xf32>
    %cst_6 = arith.constant dense<0.000000e+00> : vector<16x128xf32>
    %6 = tpu.matmul %4, %5, %cst_6 {dimension_numbers = #tpu.dot_dimension_numbers<[1], [0], [0], [1], [0, 0, 1, 1], [], []>} : vector<16x128xf32>, vector<128x128xf32>, vector<16x128xf32> -> vector<16x128xf32>
    %cst_7 = arith.constant 0.000000e+00 : f32
    %7 = vector.broadcast %cst_7 : f32 to vector<16x128xf32>
    %8 = arith.maximumf %6, %7 : vector<16x128xf32>
    %c0_8 = arith.constant 0 : index
    %c0_9 = arith.constant 0 : index
    %9 = vector.load %arg4[%c0_8, %c0_9] : memref<16x128xf32, #tpu.memory_space<vmem>>, vector<16x128xf32>
    tpu.vector_store %arg4[%c0_8, %c0_9], %8 {strides = array<i32>} : memref<16x128xf32, #tpu.memory_space<vmem>>, vector<16x128xf32>,
    return
  }
  func.func @transform_0(%arg0: i32) -> (i32, i32) {
    %c0_i32 = arith.constant 0 : i32
    %c0_i32_0 = arith.constant 0 : i32
    return %arg0, %c0_i32 : i32, i32
  }
  func.func @transform_1(%arg0: i32) -> (i32, i32) {
    %c0_i32 = arith.constant 0 : i32
    %c0_i32_0 = arith.constant 0 : i32
    %c0_i32_1 = arith.constant 0 : i32
    return %c0_i32, %c0_i32_0 : i32, i32
  }
  func.func @transform_2(%arg0: i32) -> (i32, i32) {
    %c0_i32 = arith.constant 0 : i32
    %c0_i32_0 = arith.constant 0 : i32
    %c0_i32_1 = arith.constant 0 : i32
    return %c0_i32, %c0_i32_0 : i32, i32
  }
  func.func @transform_3(%arg0: i32) -> (i32, i32) {
    %c0_i32 = arith.constant 0 : i32
    %c0_i32_0 = arith.constant 0 : i32
    return %arg0, %c0_i32 : i32, i32
  }
}

</mosaic_0001>

<llo_original>
// kernel: tpu_custom_call.1
$region0: #{tpu_custom_call.1}
  #allocation0 [shape = 'u32[]', space=smem, size = 0x4, offset = 0x4, fixed_abs, tag = 'smem constant byte address 0x4 - core index']
  #allocation1 [shape = 'u32[144,128]{1,0:T(1,128)}', space=vmem, size = 0x12000, scoped, tag = 'internal scratch']
  %s0 = inlined_call_operand.hbm [shape: f32[16,128], index: 0, kind: input, shape index: {}]
  %s1 = inlined_call_operand.hbm [shape: f32[128,128], index: 1, kind: input, shape index: {}]
  %s2 = inlined_call_operand.hbm [shape: f32[128,128], index: 2, kind: input, shape index: {}]
  %s3 = inlined_call_operand.hbm [shape: f32[16,128], index: 3, kind: output, shape index: {}]
  %s4 = sld [smem:[#allocation0]]
  $region34: #{tpu_custom_call.1} parent=0
    _
  %s6 = ssub.s32 1, %s4
  %s7 = scalar_select 0, %s6, %s4
  $region1: #{tpu_custom_call.1} parent=0
    #allocation2 [shape = 'u8[8192]{0}', space=vmem, size = 0x2000, scoped, tag = 'input window, operand 0, single buffered']
    #allocation3 [shape = 's32[1]{0}', space=sflag, size = 0x4, scoped, tag = 'scoped memory for tpu_custom_call.1']
    #allocation4 [shape = 's32[1]{0}', space=sflag, size = 0x4, scoped, tag = 'scoped memory for tpu_custom_call.1']
    #allocation5 [shape = 'u8[65536]{0}', space=vmem, size = 0x10000, scoped, tag = 'input window, operand 1, single buffered']
    #allocation6 [shape = 's32[1]{0}', space=sflag, size = 0x4, scoped, tag = 'scoped memory for tpu_custom_call.1']
    #allocation7 [shape = 'u8[65536]{0}', space=vmem, size = 0x10000, scoped, tag = 'input window, operand 2, single buffered']
    #allocation8 [shape = 'u8[8192]{0}', space=vmem, size = 0x2000, scoped, tag = 'output window, operand 0, single buffered']
    %8 = vsyncpa [#allocation3], 0
    %9 = vsyncpa [#allocation6], 0
    %10 = vsyncpa [#allocation4], 0
    // Predicated region
    $region2: #{tpu_custom_call.1} parent=1 // pred_check
      _
    $region3: #{tpu_custom_call.1} parent=1 // pred_check_branch
      %12 = sbr.rel (0) target = $region5
    $region4: #{tpu_custom_call.1} parent=1 // pred_region
      %s14 = ssub.s32 256, 256
      %15 = vsyncadd [#allocation3], %s14
      %s16 = sshll.u32 [#allocation2], 4
      %s17 = int_to_ptr.vmem [resolvable:$true] %s16
      %22 = dma.hbm_to_vmem [thread:$0]  %s0, 256, %s17, [#allocation3], 128, 128, 8
    $region5: #{tpu_custom_call.1} parent=1 // pred_fallthru
      _
    // Predicated region
    $region6: #{tpu_custom_call.1} parent=1 // pred_check
      _
    $region7: #{tpu_custom_call.1} parent=1 // pred_check_branch
      %24 = sbr.rel (0) target = $region9
    $region8: #{tpu_custom_call.1} parent=1 // pred_region
      %s26 = ssub.s32 2048, 2048
      %27 = vsyncadd [#allocation6], %s26
      %s28 = sshll.u32 [#allocation5], 4
      %s29 = int_to_ptr.vmem [resolvable:$true] %s28
      %34 = dma.hbm_to_vmem [thread:$0]  %s1, 2048, %s29, [#allocation6], 128, 128, 8
    $region9: #{tpu_custom_call.1} parent=1 // pred_fallthru
      _
    // Predicated region
    $region10: #{tpu_custom_call.1} parent=1 // pred_check
      _
    $region11: #{tpu_custom_call.1} parent=1 // pred_check_branch
      %36 = sbr.rel (0) target = $region13
    $region12: #{tpu_custom_call.1} parent=1 // pred_region
      %s38 = ssub.s32 2048, 2048
      %39 = vsyncadd [#allocation6], %s38
      %s40 = sshll.u32 [#allocation7], 4
      %s41 = int_to_ptr.vmem [resolvable:$true] %s40
      %46 = dma.hbm_to_vmem [thread:$0]  %s2, 2048, %s41, [#allocation6], 128, 128, 8
    $region13: #{tpu_custom_call.1} parent=1 // pred_fallthru
      _
    // Predicated region
    $region14: #{tpu_custom_call.1} parent=1 // pred_check
      _
    $region15: #{tpu_custom_call.1} parent=1 // pred_check_branch
      %48 = sbr.rel (0) target = $region17
    $region16: #{tpu_custom_call.1} parent=1 // pred_region
      %49 = dma.done [#allocation3], 256
    $region17: #{tpu_custom_call.1} parent=1 // pred_fallthru
      _
    // Predicated region
    $region18: #{tpu_custom_call.1} parent=1 // pred_check
      _
    $region19: #{tpu_custom_call.1} parent=1 // pred_check_branch
      %51 = sbr.rel (0) target = $region21
    $region20: #{tpu_custom_call.1} parent=1 // pred_region
      %52 = dma.done [#allocation6], 2048
    $region21: #{tpu_custom_call.1} parent=1 // pred_fallthru
      _
    // Predicated region
    $region22: #{tpu_custom_call.1} parent=1 // pred_check
      _
    $region23: #{tpu_custom_call.1} parent=1 // pred_check_branch
      %54 = sbr.rel (0) target = $region25
    $region24: #{tpu_custom_call.1} parent=1 // pred_region
      %55 = dma.done [#allocation6], 2048
    $region25: #{tpu_custom_call.1} parent=1 // pred_fallthru
      _
    %v56 = vld [vmem:[#allocation2] sm:$0xff]
    %v57 = vld [vmem:[#allocation2 + $0x8] sm:$0xff]
    %v58 = vld [vmem:[#allocation5] sm:$0xff]
    %v59 = vld [vmem:[#allocation5 + $0x8] sm:$0xff]
    %v60 = vld [vmem:[#allocation5 + $0x10] sm:$0xff]
    %v61 = vld [vmem:[#allocation5 + $0x18] sm:$0xff]
    %v62 = vld [vmem:[#allocation5 + $0x20] sm:$0xff]
    %v63 = vld [vmem:[#allocation5 + $0x28] sm:$0xff]
    %v64 = vld [vmem:[#allocation5 + $0x30] sm:$0xff]
    %v65 = vld [vmem:[#allocation5 + $0x38] sm:$0xff]
    %v66 = vld [vmem:[#allocation5 + $0x40] sm:$0xff]
    %v67 = vld [vmem:[#allocation5 + $0x48] sm:$0xff]
    %v68 = vld [vmem:[#allocation5 + $0x50] sm:$0xff]
    %v69 = vld [vmem:[#allocation5 + $0x58] sm:$0xff]
    %v70 = vld [vmem:[#allocation5 + $0x60] sm:$0xff]
    %v71 = vld [vmem:[#allocation5 + $0x68] sm:$0xff]
    %v72 = vld [vmem:[#allocation5 + $0x70] sm:$0xff]
    %v73 = vld [vmem:[#allocation5 + $0x78] sm:$0xff]
    %74 = vmatprep.subr.mxu0 0.0
    %75 = vmatpush1.msra.mxu0 %v58
    %76 = vmatprep.subr.mxu0 0.0
    %77 = vmatpush1.msra.mxu0 %v59
    %78 = vmatprep.subr.mxu0 0.0
    %79 = vmatpush1.msra.mxu0 %v60
    %80 = vmatprep.subr.mxu0 0.0
    %81 = vmatpush1.msra.mxu0 %v61
    %82 = vmatprep.subr.mxu0 0.0
    %83 = vmatpush1.msra.mxu0 %v62
    %84 = vmatprep.subr.mxu0 0.0
    %85 = vmatpush1.msra.mxu0 %v63
    %86 = vmatprep.subr.mxu0 0.0
    %87 = vmatpush1.msra.mxu0 %v64
    %88 = vmatprep.subr.mxu0 0.0
    %89 = vmatpush1.msra.mxu0 %v65
    %90 = vmatprep.subr.mxu0 0.0
    %91 = vmatpush1.msra.mxu0 %v66
    %92 = vmatprep.subr.mxu0 0.0
    %93 = vmatpush1.msra.mxu0 %v67
    %94 = vmatprep.subr.mxu0 0.0
    %95 = vmatpush1.msra.mxu0 %v68
    %96 = vmatprep.subr.mxu0 0.0
    %97 = vmatpush1.msra.mxu0 %v69
    %98 = vmatprep.subr.mxu0 0.0
    %99 = vmatpush1.msra.mxu0 %v70
    %100 = vmatprep.subr.mxu0 0.0
    %101 = vmatpush1.msra.mxu0 %v71
    %102 = vmatprep.subr.mxu0 0.0
    %103 = vmatpush1.msra.mxu0 %v72
    %104 = vmatprep.subr.mxu0 0.0
    %105 = vmatpush1.msra.mxu0 %v73
    %106 = vmatprep.subr.mxu0 0.0
    %107 = vmatpush1.msra.mxu0 0.0
    %108 = vmatprep.subr.mxu0 0.0
    %109 = vmatpush1.msra.mxu0 0.0
    %110 = vmatprep.subr.mxu0 0.0
    %111 = vmatpush1.msra.mxu0 0.0
    %112 = vmatprep.subr.mxu0 0.0
    %113 = vmatpush1.msra.mxu0 0.0
    %114 = vmatprep.subr.mxu0 0.0
    %115 = vmatpush1.msra.mxu0 0.0
    %116 = vmatprep.subr.mxu0 0.0
    %117 = vmatpush1.msra.mxu0 0.0
    %118 = vmatprep.subr.mxu0 0.0
    %119 = vmatpush1.msra.mxu0 0.0
    %120 = vmatprep.subr.mxu0 0.0
    %121 = vmatpush1.msra.mxu0 0.0
    %122 = vmatprep.subr.mxu0 0.0
    %123 = vmatpush1.msra.mxu0 0.0
    %124 = vmatprep.subr.mxu0 0.0
    %125 = vmatpush1.msra.mxu0 0.0
    %126 = vmatprep.subr.mxu0 0.0
    %127 = vmatpush1.msra.mxu0 0.0
    %128 = vmatprep.subr.mxu0 0.0
    %129 = vmatpush1.msra.mxu0 0.0
    %130 = vmatprep.subr.mxu0 0.0
    %131 = vmatpush1.msra.mxu0 0.0
    %132 = vmatprep.subr.mxu0 0.0
    %133 = vmatpush1.msra.mxu0 0.0
    %134 = vmatprep.subr.mxu0 0.0
    %135 = vmatpush1.msra.mxu0 0.0
    %136 = vmatprep.subr.mxu0 0.0
    %137 = vmatpush1.msra.mxu0 0.0
    %138 = vmatprep.mubr.f32.mxu0 0.0
    %139 = vmatmul.mubr.f32.gmra.mrb[0].mxu0 %v56
    %v140 = vpop.f32.mrb[0].mxu0
    %v141 = vadd.f32 0.0, %v140
    %v142 = vpop.f32.mrb[0].mxu0
    %143 = vmatprep.mubr.f32.mxu0 0.0
    %144 = vmatmul.mubr.f32.gmra.mrb[0].mxu0 %v57
    %v145 = vpop.f32.mrb[0].mxu0
    %v146 = vadd.f32 0.0, %v145
    %v147 = vpop.f32.mrb[0].mxu0
    %148 = vdwg.mxu0
    %v149 = vmax.f32 %v141, 0.0
    %v150 = vmax.f32 %v146, 0.0
    %v151 = vld [vmem:[#allocation7] sm:$0xff]
    %v152 = vld [vmem:[#allocation7 + $0x8] sm:$0xff]
    %v153 = vld [vmem:[#allocation7 + $0x10] sm:$0xff]
    %v154 = vld [vmem:[#allocation7 + $0x18] sm:$0xff]
    %v155 = vld [vmem:[#allocation7 + $0x20] sm:$0xff]
    %v156 = vld [vmem:[#allocation7 + $0x28] sm:$0xff]
    %v157 = vld [vmem:[#allocation7 + $0x30] sm:$0xff]
    %v158 = vld [vmem:[#allocation7 + $0x38] sm:$0xff]
    %v159 = vld [vmem:[#allocation7 + $0x40] sm:$0xff]
    %v160 = vld [vmem:[#allocation7 + $0x48] sm:$0xff]
    %v161 = vld [vmem:[#allocation7 + $0x50] sm:$0xff]
    %v162 = vld [vmem:[#allocation7 + $0x58] sm:$0xff]
    %v163 = vld [vmem:[#allocation7 + $0x60] sm:$0xff]
    %v164 = vld [vmem:[#allocation7 + $0x68] sm:$0xff]
    %v165 = vld [vmem:[#allocation7 + $0x70] sm:$0xff]
    %v166 = vld [vmem:[#allocation7 + $0x78] sm:$0xff]
    %167 = vmatprep.subr.mxu0 0.0
    %168 = vmatpush1.msra.mxu0 %v151
    %169 = vmatprep.subr.mxu0 0.0
    %170 = vmatpush1.msra.mxu0 %v152
    %171 = vmatprep.subr.mxu0 0.0
    %172 = vmatpush1.msra.mxu0 %v153
    %173 = vmatprep.subr.mxu0 0.0
    %174 = vmatpush1.msra.mxu0 %v154
    %175 = vmatprep.subr.mxu0 0.0
    %176 = vmatpush1.msra.mxu0 %v155
    %177 = vmatprep.subr.mxu0 0.0
    %178 = vmatpush1.msra.mxu0 %v156
    %179 = vmatprep.subr.mxu0 0.0
    %180 = vmatpush1.msra.mxu0 %v157
    %181 = vmatprep.subr.mxu0 0.0
    %182 = vmatpush1.msra.mxu0 %v158
    %183 = vmatprep.subr.mxu0 0.0
    %184 = vmatpush1.msra.mxu0 %v159
    %185 = vmatprep.subr.mxu0 0.0
    %186 = vmatpush1.msra.mxu0 %v160
    %187 = vmatprep.subr.mxu0 0.0
    %188 = vmatpush1.msra.mxu0 %v161
    %189 = vmatprep.subr.mxu0 0.0
    %190 = vmatpush1.msra.mxu0 %v162
    %191 = vmatprep.subr.mxu0 0.0
    %192 = vmatpush1.msra.mxu0 %v163
    %193 = vmatprep.subr.mxu0 0.0
    %194 = vmatpush1.msra.mxu0 %v164
    %195 = vmatprep.subr.mxu0 0.0
    %196 = vmatpush1.msra.mxu0 %v165
    %197 = vmatprep.subr.mxu0 0.0
    %198 = vmatpush1.msra.mxu0 %v166
    %199 = vmatprep.subr.mxu0 0.0
    %200 = vmatpush1.msra.mxu0 0.0
    %201 = vmatprep.subr.mxu0 0.0
    %202 = vmatpush1.msra.mxu0 0.0
    %203 = vmatprep.subr.mxu0 0.0
    %204 = vmatpush1.msra.mxu0 0.0
    %205 = vmatprep.subr.mxu0 0.0
    %206 = vmatpush1.msra.mxu0 0.0
    %207 = vmatprep.subr.mxu0 0.0
    %208 = vmatpush1.msra.mxu0 0.0
    %209 = vmatprep.subr.mxu0 0.0
    %210 = vmatpush1.msra.mxu0 0.0
    %211 = vmatprep.subr.mxu0 0.0
    %212 = vmatpush1.msra.mxu0 0.0
    %213 = vmatprep.subr.mxu0 0.0
    %214 = vmatpush1.msra.mxu0 0.0
    %215 = vmatprep.subr.mxu0 0.0
    %216 = vmatpush1.msra.mxu0 0.0
    %217 = vmatprep.subr.mxu0 0.0
    %218 = vmatpush1.msra.mxu0 0.0
    %219 = vmatprep.subr.mxu0 0.0
    %220 = vmatpush1.msra.mxu0 0.0
    %221 = vmatprep.subr.mxu0 0.0
    %222 = vmatpush1.msra.mxu0 0.0
    %223 = vmatprep.subr.mxu0 0.0
    %224 = vmatpush1.msra.mxu0 0.0
    %225 = vmatprep.subr.mxu0 0.0
    %226 = vmatpush1.msra.mxu0 0.0
    %227 = vmatprep.subr.mxu0 0.0
    %228 = vmatpush1.msra.mxu0 0.0
    %229 = vmatprep.subr.mxu0 0.0
    %230 = vmatpush1.msra.mxu0 0.0
    %231 = vmatprep.mubr.f32.mxu0 0.0
    %232 = vmatmul.mubr.f32.gmra.mrb[0].mxu0 %v149
    %v233 = vpop.f32.mrb[0].mxu0
    %v234 = vadd.f32 0.0, %v233
    %v235 = vpop.f32.mrb[0].mxu0
    %236 = vmatprep.mubr.f32.mxu0 0.0
    %237 = vmatmul.mubr.f32.gmra.mrb[0].mxu0 %v150
    %v238 = vpop.f32.mrb[0].mxu0
    %v239 = vadd.f32 0.0, %v238
    %v240 = vpop.f32.mrb[0].mxu0
    %241 = vdwg.mxu0
    %v242 = vmax.f32 %v234, 0.0
    %v243 = vmax.f32 %v239, 0.0
    %244 = vst [vmem:[#allocation8] sm:$0xff] %v242
    %245 = vst [vmem:[#allocation8 + $0x8] sm:$0xff] %v243
    // Predicated region
    $region26: #{tpu_custom_call.1} parent=1 // pred_check
      _
    $region27: #{tpu_custom_call.1} parent=1 // pred_check_branch
      %247 = sbr.rel (0) target = $region29
    $region28: #{tpu_custom_call.1} parent=1 // pred_region
      %s249 = ssub.s32 256, 256
      %250 = vsyncadd [#allocation4], %s249
      %s251 = sshll.u32 [#allocation8], 4
      %s252 = int_to_ptr.vmem [resolvable:$true] %s251
      %257 = dma.vmem_to_hbm [thread:$0]  %s252, 256, %s3, [#allocation4], 128, 128, 8
    $region29: #{tpu_custom_call.1} parent=1 // pred_fallthru
      _
    // Predicated region
    $region30: #{tpu_custom_call.1} parent=1 // pred_check
      _
    $region31: #{tpu_custom_call.1} parent=1 // pred_check_branch
      %259 = sbr.rel (0) target = $region33
    $region32: #{tpu_custom_call.1} parent=1 // pred_region
      %260 = dma.done [#allocation4], 256
    $region33: #{tpu_custom_call.1} parent=1 // pred_fallthru
      _
    %261 = vsyncpa [#allocation3], 1
    %262 = vsyncpa [#allocation6], 1
    %263 = vsyncpa [#allocation4], 1

</llo_original>
